<compile_context>
chip_gen: v7x
topology: tpu7x:2x2x1
jax: 0.10.0
libtpu: 0.0.40
codegen_flags: <defaults>
</compile_context>

<pallas_src>
import jax
import jax.numpy as jnp
from jax.experimental import pallas as pl
from jax.experimental.pallas import tpu as pltpu


def _encoder_kernel(x_ref, w1_ref, b1_ref, wh_ref, bh_ref, out_ref):
    # h = relu(x @ W1 + b1), f32 accumulation on the MXU.
    h = jnp.dot(x_ref[...], w1_ref[...], preferred_element_type=jnp.float32)
    h = jnp.maximum(h + b1_ref[...], 0.0)
    # Single fused head matmul: [mean | logvar] = h @ [Wm | Wv] + [bm | bv].
    h = h.astype(wh_ref.dtype)  # keep bf16 MXU path when compute dtype is bf16
    out = jnp.dot(h, wh_ref[...], preferred_element_type=jnp.float32) + bh_ref[...]
    out_ref[...] = out.astype(out_ref.dtype)


def _round_up(n, m):
    return ((n + m - 1) // m) * m


def _pick_batch_tile(batch, row_bytes, gran, target_bytes=2 << 20, max_rows=8192):
    """Batch tile ~target_bytes of x per tile, multiple of `gran` rows, and
    capped so the grid has >= 2 steps when the batch allows it (v7x megacore)."""
    if batch <= gran:
        return batch                       # block == full dim is always legal
    rows = max(gran, min(max_rows, target_bytes // max(1, row_bytes)))
    rows = max(gran, (rows // gran) * gran)
    two_step_cap = _round_up((batch + 1) // 2, gran)
    return max(gran, min(rows, two_step_cap))


def prepare_params(params, compute_dtype=jnp.bfloat16):
    """One-time fusion/padding of the BasicEncoder weights.

    params: w1[x_dim, nhid], b1[1, nhid], wm[nhid, out], bm[1, out],
            wv[nhid, out], bv[1, out]
    Returns a dict of device arrays + metadata consumed by basic_encoder_forward.
    Zero padding of the hidden dim is exact: padded hidden columns are
    relu(0 + 0) = 0 and padded head-weight rows are 0.
    """
    x_dim, nhid = params["w1"].shape
    out_dim = params["wm"].shape[1]
    # Only the y=None / ncond=0 path is kernelized.
    assert params["wm"].shape[0] == nhid and params["wv"].shape[0] == nhid, (
        "ncond > 0 (conditional concat path) is not supported by this kernel")

    cdt = jnp.dtype(compute_dtype)
    nhid_p = _round_up(nhid, 128)          # 128-wide MXU tile (ideal on v5e too)
    out2 = 2 * out_dim

    w1 = jnp.zeros((x_dim, nhid_p), cdt).at[:, :nhid].set(params["w1"].astype(cdt))
    b1 = jnp.zeros((1, nhid_p), jnp.float32).at[:, :nhid].set(
        params["b1"].astype(jnp.float32))
    wh = jnp.zeros((nhid_p, out2), cdt)
    wh = wh.at[:nhid, :out_dim].set(params["wm"].astype(cdt))
    wh = wh.at[:nhid, out_dim:].set(params["wv"].astype(cdt))
    bh = jnp.concatenate([params["bm"], params["bv"]], axis=1).astype(jnp.float32)

    return {"w1": w1, "b1": b1, "wh": wh, "bh": bh,
            "x_dim": x_dim, "nhid_p": nhid_p, "out_dim": out_dim,
            "compute_dtype": cdt}


def basic_encoder_forward(x, prepared, *, batch_tile=None):
    """Pallas forward pass for BasicEncoder (y=None / ncond=0 path).

    x: [B, x_dim]; prepared: output of prepare_params().
    Returns (mean[B, out_dim], logvar[B, out_dim]) in x.dtype.
    """
    B, x_dim = x.shape
    assert x_dim == prepared["x_dim"], "x feature dim mismatch"

    cdt = prepared["compute_dtype"]
    out_dim = prepared["out_dim"]
    nhid_p = prepared["nhid_p"]
    out2 = 2 * out_dim
    out_dtype = x.dtype
    out_isz = jnp.dtype(out_dtype).itemsize
    itemsize = cdt.itemsize

    # Sublane packing granularity for the batch tile (f32:8, bf16:16, int8/fp8:32).
    gran = 8 if itemsize >= 4 else (16 if itemsize == 2 else 32)
    row_bytes = x_dim * itemsize
    tb = batch_tile or _pick_batch_tile(B, row_bytes, gran)
    tb = min(tb, B)

    w1, b1, wh, bh = prepared["w1"], prepared["b1"], prepared["wh"], prepared["bh"]
    weight_bytes = (w1.size + wh.size) * itemsize + (b1.size + bh.size) * 4
    big_weights = (w1.size + wh.size) * itemsize > (2 << 20)
    weight_bufs = 1 if big_weights else 2   # Buffered(1) only when it matters

    def resident_bytes(t):
        return (weight_bytes * weight_bufs
                + 2 * t * row_bytes          # x tile, double-buffered
                + 2 * t * out2 * out_isz     # out tile, double-buffered
                + t * nhid_p * 4)            # f32 hidden intermediate

    # Keep the footprint comfortably inside v7x's 64 MiB (and v5e's scoped VMEM).
    budget = 40 << 20
    while tb > gran and resident_bytes(tb) > budget:
        tb = max(gran, ((tb // 2) // gran) * gran)

    grid = (pl.cdiv(B, tb),)                 # any B works; edge blocks are masked
    vmem_limit = int(min(max(2 * resident_bytes(tb) + (4 << 20), 32 << 20), 64 << 20))

    wkw = {"pipeline_mode": pl.Buffered(1)} if big_weights else {}

    def x_map(i):
        return (i, 0)

    def full_map(i):
        return (0, 0)

    cost = pl.CostEstimate(
        flops=2 * B * (x_dim * nhid_p + nhid_p * out2),
        transcendentals=0,
        bytes_accessed=int(B * row_bytes + weight_bytes + B * out2 * out_isz),
    )

    fused = pl.pallas_call(
        _encoder_kernel,
        out_shape=jax.ShapeDtypeStruct((B, out2), out_dtype),
        grid_spec=pltpu.PrefetchScalarGridSpec(
            num_scalar_prefetch=0,
            grid=grid,
            in_specs=[
                pl.BlockSpec((tb, x_dim), x_map),               # x (streamed)
                pl.BlockSpec((x_dim, nhid_p), full_map, **wkw),  # W1 (resident)
                pl.BlockSpec((1, nhid_p), full_map),             # b1
                pl.BlockSpec((nhid_p, out2), full_map, **wkw),   # [Wm | Wv]
                pl.BlockSpec((1, out2), full_map),               # [bm | bv]
            ],
            out_specs=pl.BlockSpec((tb, out2), x_map),           # [mean | logvar]
        ),
        compiler_params=pltpu.CompilerParams(
            dimension_semantics=("parallel",),
            vmem_limit_bytes=vmem_limit),
        cost_estimate=cost,
    )(x.astype(cdt), w1, b1, wh, bh)

    return fused[:, :out_dim], fused[:, out_dim:]


def init_params(key, x_dim, nhid, ncond, output_dim, dtype=jnp.float32):
    # Deterministic synthetic init (PyTorch-style uniform ranges, not a checkpoint).
    ks = jax.random.split(key, 6)

    def lin(kw, kb, fan_in, fan_out):
        bound = 1.0 / jnp.sqrt(float(fan_in))
        w = jax.random.uniform(kw, (fan_in, fan_out), dtype, -bound, bound)
        b = jax.random.uniform(kb, (1, fan_out), dtype, -bound, bound)
        return w, b

    w1, b1 = lin(ks[0], ks[1], x_dim, nhid)
    wm, bm = lin(ks[2], ks[3], nhid + ncond, output_dim)
    wv, bv = lin(ks[4], ks[5], nhid + ncond, output_dim)
    return {"w1": w1, "b1": b1, "wm": wm, "bm": bm, "wv": wv, "bv": bv}


def reference_forward(x, p):
    h = jnp.maximum(x @ p["w1"] + p["b1"], 0.0)
    return h @ p["wm"] + p["bm"], h @ p["wv"] + p["bv"]


# TODO(synk): the y-is-not-None branch (torch.cat((x, y)) along batch before the
# mean/logvar heads) and ncond > 0 conditioning are not kernelized; only the
# default y=None / ncond=0 path is implemented.

if __name__ == "__main__":
    # Module-default shapes: x_dim=512, nhid=16, output_dim=16; small batch=8.
    x_dim, nhid, ncond, output_dim = 512, 16, 0, 16
    batch = 8

    key = jax.random.PRNGKey(0)
    kx, kp, kx2 = jax.random.split(key, 3)
    x = jax.random.normal(kx, (batch, x_dim), jnp.float32)
    params = init_params(kp, x_dim, nhid, ncond, output_dim)

    ref_mean, ref_logvar = reference_forward(x, params)

    # f32 compute path (exact check).
    prep_f32 = prepare_params(params, compute_dtype=jnp.float32)
    mean, logvar = basic_encoder_forward(x, prep_f32)
    jax.block_until_ready((mean, logvar))
    assert mean.shape == (batch, output_dim) and logvar.shape == (batch, output_dim)
    assert jnp.allclose(mean, ref_mean, atol=1e-4, rtol=1e-4)
    assert jnp.allclose(logvar, ref_logvar, atol=1e-4, rtol=1e-4)

    # Default bf16 compute path (f32 accumulation; hidden activation is
    # bf16-quantized as well), loose tolerance.
    prep_bf16 = prepare_params(params)
    mean_bf, logvar_bf = basic_encoder_forward(x, prep_bf16)
    jax.block_until_ready((mean_bf, logvar_bf))
    assert jnp.allclose(mean_bf, ref_mean, atol=1e-1, rtol=1e-1)
    assert jnp.allclose(logvar_bf, ref_logvar, atol=1e-1, rtol=1e-1)

    # Non-divisible batch exercises the cdiv grid (2 grid steps, masked edge block).
    xb = jax.random.normal(kx2, (100, x_dim), jnp.float32)
    ref_mean_b, ref_logvar_b = reference_forward(xb, params)
    mean_b, logvar_b = basic_encoder_forward(xb, prep_f32)
    jax.block_until_ready((mean_b, logvar_b))
    assert mean_b.shape == (100, output_dim)
    assert jnp.allclose(mean_b, ref_mean_b, atol=1e-4, rtol=1e-4)
    assert jnp.allclose(logvar_b, ref_logvar_b, atol=1e-4, rtol=1e-4)

    print("KERNEL_OK")
</pallas_src>

<mosaic_0001>
module attributes {stable_mosaic.version = 11 : i64} {
  func.func @_encoder_kernel(%arg0: i32, %arg1: memref<8x512xf32, #tpu.memory_space<vmem>>, %arg2: memref<512x128xf32, #tpu.memory_space<vmem>>, %arg3: memref<1x128xf32, #tpu.memory_space<vmem>>, %arg4: memref<128x32xf32, #tpu.memory_space<vmem>>, %arg5: memref<1x32xf32, #tpu.memory_space<vmem>>, %arg6: memref<8x32xf32, #tpu.memory_space<vmem>>) attributes {dimension_semantics = [#tpu.dimension_semantics<parallel>], iteration_bounds = array<i64: 1>, scalar_prefetch = 0 : i64, scratch_operands = 0 : i64, tpu.core_type = #tpu.core_type<tc>, window_params = [{transform_indices = @transform_0, window_bounds = array<i64: 8, 512>}, {pipeline_mode = #tpu.pipeline_mode<synchronous>, transform_indices = @transform_1, window_bounds = array<i64: 512, 128>}, {pipeline_mode = #tpu.pipeline_mode<synchronous>, transform_indices = @transform_2, window_bounds = array<i64: 1, 128>}, {pipeline_mode = #tpu.pipeline_mode<synchronous>, transform_indices = @transform_3, window_bounds = array<i64: 128, 32>}, {pipeline_mode = #tpu.pipeline_mode<synchronous>, transform_indices = @transform_4, window_bounds = array<i64: 1, 32>}, {transform_indices = @transform_5, window_bounds = array<i64: 8, 32>}]} {
    %c0 = arith.constant 0 : index
    %c0_0 = arith.constant 0 : index
    %0 = vector.load %arg1[%c0, %c0_0] : memref<8x512xf32, #tpu.memory_space<vmem>>, vector<8x512xf32>
    %c0_1 = arith.constant 0 : index
    %c0_2 = arith.constant 0 : index
    %1 = vector.load %arg2[%c0_1, %c0_2] : memref<512x128xf32, #tpu.memory_space<vmem>>, vector<512x128xf32>
    %cst = arith.constant dense<0.000000e+00> : vector<8x128xf32>
    %2 = tpu.matmul %0, %1, %cst {dimension_numbers = #tpu.dot_dimension_numbers<[1], [0], [0], [1], [0, 0, 1, 1], [], []>} : vector<8x512xf32>, vector<512x128xf32>, vector<8x128xf32> -> vector<8x128xf32>
    %c0_3 = arith.constant 0 : index
    %c0_4 = arith.constant 0 : index
    %3 = vector.load %arg3[%c0_3, %c0_4] : memref<1x128xf32, #tpu.memory_space<vmem>>, vector<1x128xf32>
    %4 = vector.broadcast %3 : vector<1x128xf32> to vector<8x128xf32>
    %5 = arith.addf %2, %4 : vector<8x128xf32>
    %cst_5 = arith.constant 0.000000e+00 : f32
    %6 = vector.broadcast %cst_5 : f32 to vector<8x128xf32>
    %7 = arith.maximumf %5, %6 : vector<8x128xf32>
    %c0_6 = arith.constant 0 : index
    %c0_7 = arith.constant 0 : index
    %8 = vector.load %arg4[%c0_6, %c0_7] : memref<128x32xf32, #tpu.memory_space<vmem>>, vector<128x32xf32>
    %cst_8 = arith.constant dense<0.000000e+00> : vector<8x32xf32>
    %9 = tpu.matmul %7, %8, %cst_8 {dimension_numbers = #tpu.dot_dimension_numbers<[1], [0], [0], [1], [0, 0, 1, 1], [], []>} : vector<8x128xf32>, vector<128x32xf32>, vector<8x32xf32> -> vector<8x32xf32>
    %c0_9 = arith.constant 0 : index
    %c0_10 = arith.constant 0 : index
    %10 = vector.load %arg5[%c0_9, %c0_10] : memref<1x32xf32, #tpu.memory_space<vmem>>, vector<1x32xf32>
    %11 = vector.broadcast %10 : vector<1x32xf32> to vector<8x32xf32>
    %12 = arith.addf %9, %11 : vector<8x32xf32>
    %c0_11 = arith.constant 0 : index
    %c0_12 = arith.constant 0 : index
    %13 = vector.load %arg6[%c0_11, %c0_12] : memref<8x32xf32, #tpu.memory_space<vmem>>, vector<8x32xf32>
    tpu.vector_store %arg6[%c0_11, %c0_12], %12 {strides = array<i32>} : memref<8x32xf32, #tpu.memory_space<vmem>>, vector<8x32xf32>,
    return
  }
  func.func @transform_0(%arg0: i32) -> (i32, i32) {
    %c0_i32 = arith.constant 0 : i32
    %c0_i32_0 = arith.constant 0 : i32
    return %arg0, %c0_i32 : i32, i32
  }
  func.func @transform_1(%arg0: i32) -> (i32, i32) {
    %c0_i32 = arith.constant 0 : i32
    %c0_i32_0 = arith.constant 0 : i32
    %c0_i32_1 = arith.constant 0 : i32
    return %c0_i32, %c0_i32_0 : i32, i32
  }
  func.func @transform_2(%arg0: i32) -> (i32, i32) {
    %c0_i32 = arith.constant 0 : i32
    %c0_i32_0 = arith.constant 0 : i32
    %c0_i32_1 = arith.constant 0 : i32
    return %c0_i32, %c0_i32_0 : i32, i32
  }
  func.func @transform_3(%arg0: i32) -> (i32, i32) {
    %c0_i32 = arith.constant 0 : i32
    %c0_i32_0 = arith.constant 0 : i32
    %c0_i32_1 = arith.constant 0 : i32
    return %c0_i32, %c0_i32_0 : i32, i32
  }
  func.func @transform_4(%arg0: i32) -> (i32, i32) {
    %c0_i32 = arith.constant 0 : i32
    %c0_i32_0 = arith.constant 0 : i32
    %c0_i32_1 = arith.constant 0 : i32
    return %c0_i32, %c0_i32_0 : i32, i32
  }
  func.func @transform_5(%arg0: i32) -> (i32, i32) {
    %c0_i32 = arith.constant 0 : i32
    %c0_i32_0 = arith.constant 0 : i32
    return %arg0, %c0_i32 : i32, i32
  }
}

</mosaic_0001>

<llo_original>
// kernel: tpu_custom_call.1
$region0: #{tpu_custom_call.1}
  #allocation0 [shape = 'u32[]', space=smem, size = 0x4, offset = 0x4, fixed_abs, tag = 'smem constant byte address 0x4 - core index']
  #allocation1 [shape = 'u32[144,128]{1,0:T(1,128)}', space=vmem, size = 0x12000, scoped, tag = 'internal scratch']
  %s0 = inlined_call_operand.vmem [shape: f32[8,512], index: 0, kind: input, shape index: {}]
  %s1 = inlined_call_operand.hbm [shape: f32[512,128], index: 1, kind: input, shape index: {}]
  %s2 = inlined_call_operand.vmem [shape: f32[1,128], index: 2, kind: input, shape index: {}]
  %s3 = inlined_call_operand.vmem [shape: f32[128,32], index: 3, kind: input, shape index: {}]
  %s4 = inlined_call_operand.vmem [shape: f32[1,32], index: 4, kind: input, shape index: {}]
  %s5 = inlined_call_operand.hbm [shape: f32[8,32], index: 5, kind: output, shape index: {}]
  %s6 = sld [smem:[#allocation0]]
  $region34: #{tpu_custom_call.1} parent=0
    _
  %s8 = ssub.s32 1, %s6
  %s9 = scalar_select 0, %s8, %s6
  $region1: #{tpu_custom_call.1} parent=0
    #allocation2 [shape = 'u8[262144]{0}', space=vmem, size = 0x40000, scoped, tag = 'input window, operand 1, single buffered']
    #allocation3 [shape = 's32[1]{0}', space=sflag, size = 0x4, scoped, tag = 'scoped memory for tpu_custom_call.1']
    #allocation4 [shape = 's32[1]{0}', space=sflag, size = 0x4, scoped, tag = 'scoped memory for tpu_custom_call.1']
    #allocation5 [shape = 'u8[4096]{0}', space=vmem, size = 0x1000, scoped, tag = 'output window, operand 0, single buffered']
    %10 = vsyncpa [#allocation3], 0
    %11 = vsyncpa [#allocation4], 0
    // Predicated region
    $region2: #{tpu_custom_call.1} parent=1 // pred_check
      _
    $region3: #{tpu_custom_call.1} parent=1 // pred_check_branch
      %13 = sbr.rel (0) target = $region5
    $region4: #{tpu_custom_call.1} parent=1 // pred_region
      _
    $region5: #{tpu_custom_call.1} parent=1 // pred_fallthru
      _
    // Predicated region
    $region6: #{tpu_custom_call.1} parent=1 // pred_check
      _
    $region7: #{tpu_custom_call.1} parent=1 // pred_check_branch
      %15 = sbr.rel (0) target = $region9
    $region8: #{tpu_custom_call.1} parent=1 // pred_region
      %s17 = ssub.s32 8192, 8192
      %18 = vsyncadd [#allocation3], %s17
      %s19 = sshll.u32 [#allocation2], 4
      %s20 = int_to_ptr.vmem [resolvable:$true] %s19
      %25 = dma.hbm_to_vmem [thread:$0]  %s1, 8192, %s20, [#allocation3], 128, 128, 8
    $region9: #{tpu_custom_call.1} parent=1 // pred_fallthru
      _
    // Predicated region
    $region10: #{tpu_custom_call.1} parent=1 // pred_check
      _
    $region11: #{tpu_custom_call.1} parent=1 // pred_check_branch
      %27 = sbr.rel (0) target = $region13
    $region12: #{tpu_custom_call.1} parent=1 // pred_region
      _
    $region13: #{tpu_custom_call.1} parent=1 // pred_fallthru
      _
    // Predicated region
    $region14: #{tpu_custom_call.1} parent=1 // pred_check
      _
    $region15: #{tpu_custom_call.1} parent=1 // pred_check_branch
      %29 = sbr.rel (0) target = $region17
    $region16: #{tpu_custom_call.1} parent=1 // pred_region
      _
    $region17: #{tpu_custom_call.1} parent=1 // pred_fallthru
      _
    // Predicated region
    $region18: #{tpu_custom_call.1} parent=1 // pred_check
      _
    $region19: #{tpu_custom_call.1} parent=1 // pred_check_branch
      %31 = sbr.rel (0) target = $region21
    $region20: #{tpu_custom_call.1} parent=1 // pred_region
      _
    $region21: #{tpu_custom_call.1} parent=1 // pred_fallthru
      _
    // Predicated region
    $region22: #{tpu_custom_call.1} parent=1 // pred_check
      _
    $region23: #{tpu_custom_call.1} parent=1 // pred_check_branch
      %33 = sbr.rel (0) target = $region25
    $region24: #{tpu_custom_call.1} parent=1 // pred_region
      %34 = dma.done [#allocation3], 8192
    $region25: #{tpu_custom_call.1} parent=1 // pred_fallthru
      _
    %v35 = vld [vmem:[%s0] sm:$0xff]
    %v36 = vld [vmem:[%s0 + $0x8] sm:$0xff]
    %v37 = vld [vmem:[%s0 + $0x10] sm:$0xff]
    %v38 = vld [vmem:[%s0 + $0x18] sm:$0xff]
    %v39 = vld [vmem:[#allocation2] sm:$0xff]
    %v40 = vld [vmem:[#allocation2 + $0x8] sm:$0xff]
    %v41 = vld [vmem:[#allocation2 + $0x10] sm:$0xff]
    %v42 = vld [vmem:[#allocation2 + $0x18] sm:$0xff]
    %v43 = vld [vmem:[#allocation2 + $0x20] sm:$0xff]
    %v44 = vld [vmem:[#allocation2 + $0x28] sm:$0xff]
    %v45 = vld [vmem:[#allocation2 + $0x30] sm:$0xff]
    %v46 = vld [vmem:[#allocation2 + $0x38] sm:$0xff]
    %v47 = vld [vmem:[#allocation2 + $0x40] sm:$0xff]
    %v48 = vld [vmem:[#allocation2 + $0x48] sm:$0xff]
    %v49 = vld [vmem:[#allocation2 + $0x50] sm:$0xff]
    %v50 = vld [vmem:[#allocation2 + $0x58] sm:$0xff]
    %v51 = vld [vmem:[#allocation2 + $0x60] sm:$0xff]
    %v52 = vld [vmem:[#allocation2 + $0x68] sm:$0xff]
    %v53 = vld [vmem:[#allocation2 + $0x70] sm:$0xff]
    %v54 = vld [vmem:[#allocation2 + $0x78] sm:$0xff]
    %v55 = vld [vmem:[#allocation2 + $0x80] sm:$0xff]
    %v56 = vld [vmem:[#allocation2 + $0x88] sm:$0xff]
    %v57 = vld [vmem:[#allocation2 + $0x90] sm:$0xff]
    %v58 = vld [vmem:[#allocation2 + $0x98] sm:$0xff]
    %v59 = vld [vmem:[#allocation2 + $0xa0] sm:$0xff]
    %v60 = vld [vmem:[#allocation2 + $0xa8] sm:$0xff]
    %v61 = vld [vmem:[#allocation2 + $0xb0] sm:$0xff]
    %v62 = vld [vmem:[#allocation2 + $0xb8] sm:$0xff]
    %v63 = vld [vmem:[#allocation2 + $0xc0] sm:$0xff]
    %v64 = vld [vmem:[#allocation2 + $0xc8] sm:$0xff]
    %v65 = vld [vmem:[#allocation2 + $0xd0] sm:$0xff]
    %v66 = vld [vmem:[#allocation2 + $0xd8] sm:$0xff]
    %v67 = vld [vmem:[#allocation2 + $0xe0] sm:$0xff]
    %v68 = vld [vmem:[#allocation2 + $0xe8] sm:$0xff]
    %v69 = vld [vmem:[#allocation2 + $0xf0] sm:$0xff]
    %v70 = vld [vmem:[#allocation2 + $0xf8] sm:$0xff]
    %v71 = vld [vmem:[#allocation2 + $0x100] sm:$0xff]
    %v72 = vld [vmem:[#allocation2 + $0x108] sm:$0xff]
    %v73 = vld [vmem:[#allocation2 + $0x110] sm:$0xff]
    %v74 = vld [vmem:[#allocation2 + $0x118] sm:$0xff]
    %v75 = vld [vmem:[#allocation2 + $0x120] sm:$0xff]
    %v76 = vld [vmem:[#allocation2 + $0x128] sm:$0xff]
    %v77 = vld [vmem:[#allocation2 + $0x130] sm:$0xff]
    %v78 = vld [vmem:[#allocation2 + $0x138] sm:$0xff]
    %v79 = vld [vmem:[#allocation2 + $0x140] sm:$0xff]
    %v80 = vld [vmem:[#allocation2 + $0x148] sm:$0xff]
    %v81 = vld [vmem:[#allocation2 + $0x150] sm:$0xff]
    %v82 = vld [vmem:[#allocation2 + $0x158] sm:$0xff]
    %v83 = vld [vmem:[#allocation2 + $0x160] sm:$0xff]
    %v84 = vld [vmem:[#allocation2 + $0x168] sm:$0xff]
    %v85 = vld [vmem:[#allocation2 + $0x170] sm:$0xff]
    %v86 = vld [vmem:[#allocation2 + $0x178] sm:$0xff]
    %v87 = vld [vmem:[#allocation2 + $0x180] sm:$0xff]
    %v88 = vld [vmem:[#allocation2 + $0x188] sm:$0xff]
    %v89 = vld [vmem:[#allocation2 + $0x190] sm:$0xff]
    %v90 = vld [vmem:[#allocation2 + $0x198] sm:$0xff]
    %v91 = vld [vmem:[#allocation2 + $0x1a0] sm:$0xff]
    %v92 = vld [vmem:[#allocation2 + $0x1a8] sm:$0xff]
    %v93 = vld [vmem:[#allocation2 + $0x1b0] sm:$0xff]
    %v94 = vld [vmem:[#allocation2 + $0x1b8] sm:$0xff]
    %v95 = vld [vmem:[#allocation2 + $0x1c0] sm:$0xff]
    %v96 = vld [vmem:[#allocation2 + $0x1c8] sm:$0xff]
    %v97 = vld [vmem:[#allocation2 + $0x1d0] sm:$0xff]
    %v98 = vld [vmem:[#allocation2 + $0x1d8] sm:$0xff]
    %v99 = vld [vmem:[#allocation2 + $0x1e0] sm:$0xff]
    %v100 = vld [vmem:[#allocation2 + $0x1e8] sm:$0xff]
    %v101 = vld [vmem:[#allocation2 + $0x1f0] sm:$0xff]
    %v102 = vld [vmem:[#allocation2 + $0x1f8] sm:$0xff]
    %v103 = vld [vmem:[%s2] sm:$0x1]
    %v105 = vlaneseq
    %v106 = vshrl.u32 %v105, 7
    %v107 = vsub.s32 0, %v106
    %v108 = vrot.slane %v103, %v107
    %110 = vmatprep.subr.mxu0 0.0
    %111 = vmatpush1.msra.mxu0 %v39
    %112 = vmatprep.subr.mxu0 0.0
    %113 = vmatpush1.msra.mxu0 %v40
    %114 = vmatprep.subr.mxu0 0.0
    %115 = vmatpush1.msra.mxu0 %v41
    %116 = vmatprep.subr.mxu0 0.0
    %117 = vmatpush1.msra.mxu0 %v42
    %118 = vmatprep.subr.mxu0 0.0
    %119 = vmatpush1.msra.mxu0 %v43
    %120 = vmatprep.subr.mxu0 0.0
    %121 = vmatpush1.msra.mxu0 %v44
    %122 = vmatprep.subr.mxu0 0.0
    %123 = vmatpush1.msra.mxu0 %v45
    %124 = vmatprep.subr.mxu0 0.0
    %125 = vmatpush1.msra.mxu0 %v46
    %126 = vmatprep.subr.mxu0 0.0
    %127 = vmatpush1.msra.mxu0 %v47
    %128 = vmatprep.subr.mxu0 0.0
    %129 = vmatpush1.msra.mxu0 %v48
    %130 = vmatprep.subr.mxu0 0.0
    %131 = vmatpush1.msra.mxu0 %v49
    %132 = vmatprep.subr.mxu0 0.0
    %133 = vmatpush1.msra.mxu0 %v50
    %134 = vmatprep.subr.mxu0 0.0
    %135 = vmatpush1.msra.mxu0 %v51
    %136 = vmatprep.subr.mxu0 0.0
    %137 = vmatpush1.msra.mxu0 %v52
    %138 = vmatprep.subr.mxu0 0.0
    %139 = vmatpush1.msra.mxu0 %v53
    %140 = vmatprep.subr.mxu0 0.0
    %141 = vmatpush1.msra.mxu0 %v54
    %142 = vmatprep.subr.mxu0 0.0
    %143 = vmatpush1.msra.mxu0 %v55
    %144 = vmatprep.subr.mxu0 0.0
    %145 = vmatpush1.msra.mxu0 %v56
    %146 = vmatprep.subr.mxu0 0.0
    %147 = vmatpush1.msra.mxu0 %v57
    %148 = vmatprep.subr.mxu0 0.0
    %149 = vmatpush1.msra.mxu0 %v58
    %150 = vmatprep.subr.mxu0 0.0
    %151 = vmatpush1.msra.mxu0 %v59
    %152 = vmatprep.subr.mxu0 0.0
    %153 = vmatpush1.msra.mxu0 %v60
    %154 = vmatprep.subr.mxu0 0.0
    %155 = vmatpush1.msra.mxu0 %v61
    %156 = vmatprep.subr.mxu0 0.0
    %157 = vmatpush1.msra.mxu0 %v62
    %158 = vmatprep.subr.mxu0 0.0
    %159 = vmatpush1.msra.mxu0 %v63
    %160 = vmatprep.subr.mxu0 0.0
    %161 = vmatpush1.msra.mxu0 %v64
    %162 = vmatprep.subr.mxu0 0.0
    %163 = vmatpush1.msra.mxu0 %v65
    %164 = vmatprep.subr.mxu0 0.0
    %165 = vmatpush1.msra.mxu0 %v66
    %166 = vmatprep.subr.mxu0 0.0
    %167 = vmatpush1.msra.mxu0 %v67
    %168 = vmatprep.subr.mxu0 0.0
    %169 = vmatpush1.msra.mxu0 %v68
    %170 = vmatprep.subr.mxu0 0.0
    %171 = vmatpush1.msra.mxu0 %v69
    %172 = vmatprep.subr.mxu0 0.0
    %173 = vmatpush1.msra.mxu0 %v70
    %174 = vmatprep.mubr.f32.mxu0 %v36
    %175 = vmatmul.mubr.f32.gmra.mrb[0].mxu0 %v35
    %v176 = vpop.f32.mrb[0].mxu0
    %v177 = vadd.f32 %v108, %v176
    %v178 = vpop.f32.mrb[0].mxu0
    %179 = vdwg.mxu0
    %180 = vmatprep.subr.mxu0 0.0
    %181 = vmatpush1.msra.mxu0 %v71
    %182 = vmatprep.subr.mxu0 0.0
    %183 = vmatpush1.msra.mxu0 %v72
    %184 = vmatprep.subr.mxu0 0.0
    %185 = vmatpush1.msra.mxu0 %v73
    %186 = vmatprep.subr.mxu0 0.0
    %187 = vmatpush1.msra.mxu0 %v74
    %188 = vmatprep.subr.mxu0 0.0
    %189 = vmatpush1.msra.mxu0 %v75
    %190 = vmatprep.subr.mxu0 0.0
    %191 = vmatpush1.msra.mxu0 %v76
    %192 = vmatprep.subr.mxu0 0.0
    %193 = vmatpush1.msra.mxu0 %v77
    %194 = vmatprep.subr.mxu0 0.0
    %195 = vmatpush1.msra.mxu0 %v78
    %196 = vmatprep.subr.mxu0 0.0
    %197 = vmatpush1.msra.mxu0 %v79
    %198 = vmatprep.subr.mxu0 0.0
    %199 = vmatpush1.msra.mxu0 %v80
    %200 = vmatprep.subr.mxu0 0.0
    %201 = vmatpush1.msra.mxu0 %v81
    %202 = vmatprep.subr.mxu0 0.0
    %203 = vmatpush1.msra.mxu0 %v82
    %204 = vmatprep.subr.mxu0 0.0
    %205 = vmatpush1.msra.mxu0 %v83
    %206 = vmatprep.subr.mxu0 0.0
    %207 = vmatpush1.msra.mxu0 %v84
    %208 = vmatprep.subr.mxu0 0.0
    %209 = vmatpush1.msra.mxu0 %v85
    %210 = vmatprep.subr.mxu0 0.0
    %211 = vmatpush1.msra.mxu0 %v86
    %212 = vmatprep.subr.mxu0 0.0
    %213 = vmatpush1.msra.mxu0 %v87
    %214 = vmatprep.subr.mxu0 0.0
    %215 = vmatpush1.msra.mxu0 %v88
    %216 = vmatprep.subr.mxu0 0.0
    %217 = vmatpush1.msra.mxu0 %v89
    %218 = vmatprep.subr.mxu0 0.0
    %219 = vmatpush1.msra.mxu0 %v90
    %220 = vmatprep.subr.mxu0 0.0
    %221 = vmatpush1.msra.mxu0 %v91
    %222 = vmatprep.subr.mxu0 0.0
    %223 = vmatpush1.msra.mxu0 %v92
    %224 = vmatprep.subr.mxu0 0.0
    %225 = vmatpush1.msra.mxu0 %v93
    %226 = vmatprep.subr.mxu0 0.0
    %227 = vmatpush1.msra.mxu0 %v94
    %228 = vmatprep.subr.mxu0 0.0
    %229 = vmatpush1.msra.mxu0 %v95
    %230 = vmatprep.subr.mxu0 0.0
    %231 = vmatpush1.msra.mxu0 %v96
    %232 = vmatprep.subr.mxu0 0.0
    %233 = vmatpush1.msra.mxu0 %v97
    %234 = vmatprep.subr.mxu0 0.0
    %235 = vmatpush1.msra.mxu0 %v98
    %236 = vmatprep.subr.mxu0 0.0
    %237 = vmatpush1.msra.mxu0 %v99
    %238 = vmatprep.subr.mxu0 0.0
    %239 = vmatpush1.msra.mxu0 %v100
    %240 = vmatprep.subr.mxu0 0.0
    %241 = vmatpush1.msra.mxu0 %v101
    %242 = vmatprep.subr.mxu0 0.0
    %243 = vmatpush1.msra.mxu0 %v102
    %244 = vmatprep.mubr.f32.mxu0 %v38
    %245 = vmatmul.mubr.f32.gmra.mrb[0].mxu0 %v37
    %v246 = vpop.f32.mrb[0].mxu0
    %v247 = vadd.f32 %v177, %v246
    %v248 = vpop.f32.mrb[0].mxu0
    %249 = vdwg.mxu0
    %v250 = vmax.f32 %v247, 0.0
    %v251 = vld [vmem:[%s3] sm:$0xff]
    %v252 = vld [vmem:[%s3 + $0x8] sm:$0xff]
    %v253 = vld [vmem:[%s3 + $0x10] sm:$0xff]
    %v254 = vld [vmem:[%s3 + $0x18] sm:$0xff]
    %v255 = vld [vmem:[%s3 + $0x20] sm:$0xff]
    %v256 = vld [vmem:[%s3 + $0x28] sm:$0xff]
    %v257 = vld [vmem:[%s3 + $0x30] sm:$0xff]
    %v258 = vld [vmem:[%s3 + $0x38] sm:$0xff]
    %v259 = vld [vmem:[%s3 + $0x40] sm:$0xff]
    %v260 = vld [vmem:[%s3 + $0x48] sm:$0xff]
    %v261 = vld [vmem:[%s3 + $0x50] sm:$0xff]
    %v262 = vld [vmem:[%s3 + $0x58] sm:$0xff]
    %v263 = vld [vmem:[%s3 + $0x60] sm:$0xff]
    %v264 = vld [vmem:[%s3 + $0x68] sm:$0xff]
    %v265 = vld [vmem:[%s3 + $0x70] sm:$0xff]
    %v266 = vld [vmem:[%s3 + $0x78] sm:$0xff]
    %v267 = vld [vmem:[%s4] sm:$0x1]
    %v269 = vlaneseq
    %v270 = vshrl.u32 %v269, 7
    %v271 = vsub.s32 0, %v270
    %v272 = vrot.slane %v267, %v271
    %274 = vmatprep.subr.mxu0 0.0
    %275 = vmatpush1.msra.mxu0 %v251
    %276 = vmatprep.subr.mxu0 0.0
    %277 = vmatpush1.msra.mxu0 %v252
    %278 = vmatprep.subr.mxu0 0.0
    %279 = vmatpush1.msra.mxu0 %v253
    %280 = vmatprep.subr.mxu0 0.0
    %281 = vmatpush1.msra.mxu0 %v254
    %282 = vmatprep.subr.mxu0 0.0
    %283 = vmatpush1.msra.mxu0 %v255
    %284 = vmatprep.subr.mxu0 0.0
    %285 = vmatpush1.msra.mxu0 %v256
    %286 = vmatprep.subr.mxu0 0.0
    %287 = vmatpush1.msra.mxu0 %v257
    %288 = vmatprep.subr.mxu0 0.0
    %289 = vmatpush1.msra.mxu0 %v258
    %290 = vmatprep.subr.mxu0 0.0
    %291 = vmatpush1.msra.mxu0 %v259
    %292 = vmatprep.subr.mxu0 0.0
    %293 = vmatpush1.msra.mxu0 %v260
    %294 = vmatprep.subr.mxu0 0.0
    %295 = vmatpush1.msra.mxu0 %v261
    %296 = vmatprep.subr.mxu0 0.0
    %297 = vmatpush1.msra.mxu0 %v262
    %298 = vmatprep.subr.mxu0 0.0
    %299 = vmatpush1.msra.mxu0 %v263
    %300 = vmatprep.subr.mxu0 0.0
    %301 = vmatpush1.msra.mxu0 %v264
    %302 = vmatprep.subr.mxu0 0.0
    %303 = vmatpush1.msra.mxu0 %v265
    %304 = vmatprep.subr.mxu0 0.0
    %305 = vmatpush1.msra.mxu0 %v266
    %306 = vmatprep.subr.mxu0 0.0
    %307 = vmatpush1.msra.mxu0 0.0
    %308 = vmatprep.subr.mxu0 0.0
    %309 = vmatpush1.msra.mxu0 0.0
    %310 = vmatprep.subr.mxu0 0.0
    %311 = vmatpush1.msra.mxu0 0.0
    %312 = vmatprep.subr.mxu0 0.0
    %313 = vmatpush1.msra.mxu0 0.0
    %314 = vmatprep.subr.mxu0 0.0
    %315 = vmatpush1.msra.mxu0 0.0
    %316 = vmatprep.subr.mxu0 0.0
    %317 = vmatpush1.msra.mxu0 0.0
    %318 = vmatprep.subr.mxu0 0.0
    %319 = vmatpush1.msra.mxu0 0.0
    %320 = vmatprep.subr.mxu0 0.0
    %321 = vmatpush1.msra.mxu0 0.0
    %322 = vmatprep.subr.mxu0 0.0
    %323 = vmatpush1.msra.mxu0 0.0
    %324 = vmatprep.subr.mxu0 0.0
    %325 = vmatpush1.msra.mxu0 0.0
    %326 = vmatprep.subr.mxu0 0.0
    %327 = vmatpush1.msra.mxu0 0.0
    %328 = vmatprep.subr.mxu0 0.0
    %329 = vmatpush1.msra.mxu0 0.0
    %330 = vmatprep.subr.mxu0 0.0
    %331 = vmatpush1.msra.mxu0 0.0
    %332 = vmatprep.subr.mxu0 0.0
    %333 = vmatpush1.msra.mxu0 0.0
    %334 = vmatprep.subr.mxu0 0.0
    %335 = vmatpush1.msra.mxu0 0.0
    %336 = vmatprep.subr.mxu0 0.0
    %337 = vmatpush1.msra.mxu0 0.0
    %338 = vmatprep.mubr.f32.mxu0 0.0
    %339 = vmatmul.mubr.f32.gmra.mrb[0].mxu0 %v250
    %v340 = vpop.f32.mrb[0].mxu0
    %v341 = vadd.f32 %v272, %v340
    %v342 = vpop.f32.mrb[0].mxu0
    %343 = vdwg.mxu0
    %vm344 = vcmask 261120
    %345 = vst.msk [vmem:[#allocation5] sm:$0xff] %vm344, %v341
    // Predicated region
    $region26: #{tpu_custom_call.1} parent=1 // pred_check
      _
    $region27: #{tpu_custom_call.1} parent=1 // pred_check_branch
      %347 = sbr.rel (0) target = $region29
    $region28: #{tpu_custom_call.1} parent=1 // pred_region
      %s349 = ssub.s32 128, 128
      %350 = vsyncadd [#allocation4], %s349
      %s352 = sshll.u32 [#allocation5], 4
      %s353 = int_to_ptr.vmem [resolvable:$true] %s352
      %355 = dma.vmem_to_hbm [thread:$0]  %s353, 128, %s5, [#allocation4]
    $region29: #{tpu_custom_call.1} parent=1 // pred_fallthru
      _
    // Predicated region
    $region30: #{tpu_custom_call.1} parent=1 // pred_check
      _
    $region31: #{tpu_custom_call.1} parent=1 // pred_check_branch
      %357 = sbr.rel (0) target = $region33
    $region32: #{tpu_custom_call.1} parent=1 // pred_region
      %358 = dma.done [#allocation4], 128
    $region33: #{tpu_custom_call.1} parent=1 // pred_fallthru
      _
    %359 = vsyncpa [#allocation3], 1
    %360 = vsyncpa [#allocation4], 1

</llo_original>
